<compile_context>
chip_gen: v7x
topology: tpu7x:2x2x1
jax: 0.10.0
libtpu: 0.0.40
codegen_flags: <defaults>
</compile_context>

<pallas_src>
import functools

import jax
import jax.numpy as jnp
from jax.experimental import pallas as pl
from jax.experimental.pallas import tpu as pltpu


def fused_rnn_kernel(seq, batch, emb_ref, w_ih_ref, w_hh_ref, b_ref,
                     w_out_ref, b_out_ref, out_ref, xproj_ref, hall_ref):
    """Single-invocation fused RNN forward.

    emb_ref   : (seq*batch, n_factors)  embedded tokens, time-major rows
    w_ih_ref  : (n_factors, n_hidden)   input weights (pre-transposed)
    w_hh_ref  : (n_hidden, n_hidden)    recurrent weights (pre-transposed)
    b_ref     : (1, n_hidden)           b_ih + b_hh (pre-combined)
    w_out_ref : (n_hidden, vocab)       output weights (pre-transposed)
    b_out_ref : (1, vocab)
    out_ref   : (seq*batch, vocab)      log-probabilities
    xproj_ref : (seq*batch, n_hidden)   VMEM scratch, hoisted input projection
    hall_ref  : (seq*batch, n_hidden)   VMEM scratch, all hidden states
    """
    n_hidden = w_hh_ref.shape[0]

    # ---- 1) Non-recurrent input projection: one big MXU GEMM + bias --------
    xproj_ref[...] = (
        jnp.dot(emb_ref[...], w_ih_ref[...], preferred_element_type=jnp.float32)
        + b_ref[...])

    # ---- 2) Serial recurrence: per-step only (batch,H)@(H,H) + tanh --------
    w_hh = w_hh_ref[...]
    h0 = jnp.zeros((batch, n_hidden), jnp.float32)   # init_hidden = zeros

    def step(t, h):
        start = pl.multiple_of(t * batch, batch)
        x_t = xproj_ref[pl.ds(start, batch), :]
        h_new = jnp.tanh(
            x_t + jnp.dot(h, w_hh, preferred_element_type=jnp.float32))
        hall_ref[pl.ds(start, batch), :] = h_new
        return h_new

    jax.lax.fori_loop(0, seq, step, h0, unroll=True)

    # ---- 3) Batched output projection + log_softmax (off the critical path)
    logits = (jnp.dot(hall_ref[...], w_out_ref[...],
                      preferred_element_type=jnp.float32) + b_out_ref[...])
    m = jnp.max(logits, axis=-1, keepdims=True)
    shifted = logits - m
    lse = jnp.log(jnp.sum(jnp.exp(shifted), axis=-1, keepdims=True))
    out_ref[...] = shifted - lse


@jax.jit
def rnn_forward(tokens, embed_tbl, w_ih_t, w_hh_t, b_ih, b_hh, w_out_t, b_out):
    # tokens: (seq, batch) int32
    # TODO(synk): embedding gather stays in XLA (jnp.take); an in-kernel
    # scalar-prefetch row-gather only pays off at much larger activations.
    emb = jnp.take(embed_tbl, tokens, axis=0)          # (seq, batch, n_factors)
    seq, batch, n_factors = emb.shape
    n_hidden = w_hh_t.shape[0]
    vocab = w_out_t.shape[1]

    emb2d = emb.reshape(seq * batch, n_factors)        # row index = t*batch + b
    b_comb = (b_ih + b_hh).reshape(1, n_hidden)        # biases only ever summed

    kernel = functools.partial(fused_rnn_kernel, seq, batch)
    vmem = lambda: pl.BlockSpec(memory_space=pltpu.MemorySpace.VMEM)

    out = pl.pallas_call(
        kernel,
        out_shape=jax.ShapeDtypeStruct((seq * batch, vocab), jnp.float32),
        in_specs=[vmem() for _ in range(6)],
        out_specs=vmem(),
        scratch_shapes=[
            pltpu.VMEM((seq * batch, n_hidden), jnp.float32),   # xproj
            pltpu.VMEM((seq * batch, n_hidden), jnp.float32),   # all h_t
        ],
    )(emb2d, w_ih_t, w_hh_t, b_comb, w_out_t, b_out)

    return out                                          # (seq*batch, vocab)


def rnn_reference(tokens, embed_tbl, w_ih_t, w_hh_t, b_ih, b_hh, w_out_t, b_out):
    """Pure-JAX reference matching the PyTorch forward (for correctness check)."""
    emb = jnp.take(embed_tbl, tokens, axis=0)
    seq, batch, _ = emb.shape
    n_hidden = w_hh_t.shape[0]
    h = jnp.zeros((batch, n_hidden), jnp.float32)
    hs = []
    for t in range(seq):
        h = jnp.tanh(emb[t] @ w_ih_t + b_ih + h @ w_hh_t + b_hh)
        hs.append(h)
    hall = jnp.stack(hs, axis=0).reshape(seq * batch, n_hidden)
    logits = hall @ w_out_t + b_out
    return jax.nn.log_softmax(logits, axis=-1)


def init_params(key, vocab_size, n_factors, n_hidden):
    ks = jax.random.split(key, 7)
    k_rnn = 1.0 / jnp.sqrt(n_hidden)
    k_lin = 1.0 / jnp.sqrt(n_hidden)
    embed_tbl = jax.random.normal(ks[0], (vocab_size, n_factors), jnp.float32)
    # Stored pre-transposed: (in, out) so the kernel does x @ W directly.
    w_ih_t = jax.random.uniform(ks[1], (n_factors, n_hidden), jnp.float32,
                                -k_rnn, k_rnn)
    w_hh_t = jax.random.uniform(ks[2], (n_hidden, n_hidden), jnp.float32,
                                -k_rnn, k_rnn)
    b_ih = jax.random.uniform(ks[3], (1, n_hidden), jnp.float32, -k_rnn, k_rnn)
    b_hh = jax.random.uniform(ks[4], (1, n_hidden), jnp.float32, -k_rnn, k_rnn)
    w_out_t = jax.random.uniform(ks[5], (n_hidden, vocab_size), jnp.float32,
                                 -k_lin, k_lin)
    b_out = jax.random.uniform(ks[6], (1, vocab_size), jnp.float32,
                               -k_lin, k_lin)
    return embed_tbl, w_ih_t, w_hh_t, b_ih, b_hh, w_out_t, b_out


if __name__ == "__main__":
    vocab_size = 128
    n_factors = 32
    n_hidden = 32
    batch = 8
    seq = 8

    key = jax.random.PRNGKey(0)
    k_tok, k_par = jax.random.split(key)
    params = init_params(k_par, vocab_size, n_factors, n_hidden)
    tokens = jax.random.randint(k_tok, (seq, batch), 0, vocab_size, jnp.int32)

    out = jax.block_until_ready(rnn_forward(tokens, *params))
    assert out.shape == (seq * batch, vocab_size), out.shape

    # log_softmax rows should exponentiate to ~1
    row_sums = jnp.exp(out).sum(axis=-1)
    assert jnp.allclose(row_sums, 1.0, atol=1e-4), row_sums

    # match the pure-JAX reference of the PyTorch forward
    ref = rnn_reference(tokens, *params)
    max_err = float(jnp.max(jnp.abs(out - ref)))
    assert jnp.allclose(out, ref, atol=1e-4, rtol=1e-4), max_err

    print("KERNEL_OK")
</pallas_src>

<mosaic_0001>
module attributes {stable_mosaic.version = 11 : i64} {
  func.func @fused_rnn_kernel(%arg0: memref<64x32xf32, #tpu.memory_space<vmem>>, %arg1: memref<32x32xf32, #tpu.memory_space<vmem>>, %arg2: memref<32x32xf32, #tpu.memory_space<vmem>>, %arg3: memref<1x32xf32, #tpu.memory_space<vmem>>, %arg4: memref<32x128xf32, #tpu.memory_space<vmem>>, %arg5: memref<1x128xf32, #tpu.memory_space<vmem>>, %arg6: memref<64x128xf32, #tpu.memory_space<vmem>>, %arg7: memref<64x32xf32, #tpu.memory_space<vmem>>, %arg8: memref<64x32xf32, #tpu.memory_space<vmem>>) attributes {dimension_semantics = [], scalar_prefetch = 0 : i64, scratch_operands = 2 : i64, tpu.core_type = #tpu.core_type<tc>} {
    %c0 = arith.constant 0 : index
    %c0_0 = arith.constant 0 : index
    %0 = vector.load %arg0[%c0, %c0_0] : memref<64x32xf32, #tpu.memory_space<vmem>>, vector<64x32xf32>
    %c0_1 = arith.constant 0 : index
    %c0_2 = arith.constant 0 : index
    %1 = vector.load %arg1[%c0_1, %c0_2] : memref<32x32xf32, #tpu.memory_space<vmem>>, vector<32x32xf32>
    %cst = arith.constant dense<0.000000e+00> : vector<64x32xf32>
    %2 = tpu.matmul %0, %1, %cst {dimension_numbers = #tpu.dot_dimension_numbers<[1], [0], [0], [1], [0, 0, 1, 1], [], []>} : vector<64x32xf32>, vector<32x32xf32>, vector<64x32xf32> -> vector<64x32xf32>
    %c0_3 = arith.constant 0 : index
    %c0_4 = arith.constant 0 : index
    %3 = vector.load %arg3[%c0_3, %c0_4] : memref<1x32xf32, #tpu.memory_space<vmem>>, vector<1x32xf32>
    %4 = vector.broadcast %3 : vector<1x32xf32> to vector<64x32xf32>
    %5 = arith.addf %2, %4 : vector<64x32xf32>
    %c0_5 = arith.constant 0 : index
    %c0_6 = arith.constant 0 : index
    %6 = vector.load %arg7[%c0_5, %c0_6] : memref<64x32xf32, #tpu.memory_space<vmem>>, vector<64x32xf32>
    tpu.vector_store %arg7[%c0_5, %c0_6], %5 {strides = array<i32>} : memref<64x32xf32, #tpu.memory_space<vmem>>, vector<64x32xf32>,
    %c0_7 = arith.constant 0 : index
    %c0_8 = arith.constant 0 : index
    %7 = vector.load %arg2[%c0_7, %c0_8] : memref<32x32xf32, #tpu.memory_space<vmem>>, vector<32x32xf32>
    %cst_9 = arith.constant 0.000000e+00 : f32
    %8 = vector.broadcast %cst_9 : f32 to vector<8x32xf32>
    %c0_i32 = arith.constant 0 : i32
    %c8_i32 = arith.constant 8 : i32
    %9 = arith.muli %c0_i32, %c8_i32 : i32
    %10 = tpu.assume_multiple %9, 8 : i32
    %11 = arith.index_cast %10 : i32 to index
    %c0_10 = arith.constant 0 : index
    %12 = vector.load %arg7[%11, %c0_10] : memref<64x32xf32, #tpu.memory_space<vmem>>, vector<8x32xf32>
    %cst_11 = arith.constant dense<0.000000e+00> : vector<8x32xf32>
    %13 = tpu.matmul %8, %7, %cst_11 {dimension_numbers = #tpu.dot_dimension_numbers<[1], [0], [0], [1], [0, 0, 1, 1], [], []>} : vector<8x32xf32>, vector<32x32xf32>, vector<8x32xf32> -> vector<8x32xf32>
    %14 = arith.addf %12, %13 : vector<8x32xf32>
    %15 = math.tanh %14 : vector<8x32xf32>
    %16 = arith.index_cast %10 : i32 to index
    %c0_12 = arith.constant 0 : index
    %17 = vector.load %arg8[%16, %c0_12] : memref<64x32xf32, #tpu.memory_space<vmem>>, vector<8x32xf32>
    tpu.vector_store %arg8[%16, %c0_12], %15 {strides = array<i32>} : memref<64x32xf32, #tpu.memory_space<vmem>>, vector<8x32xf32>,
    %c1_i32 = arith.constant 1 : i32
    %c8_i32_13 = arith.constant 8 : i32
    %18 = arith.muli %c1_i32, %c8_i32_13 : i32
    %19 = tpu.assume_multiple %18, 8 : i32
    %20 = arith.index_cast %19 : i32 to index
    %c0_14 = arith.constant 0 : index
    %21 = vector.load %arg7[%20, %c0_14] : memref<64x32xf32, #tpu.memory_space<vmem>>, vector<8x32xf32>
    %cst_15 = arith.constant dense<0.000000e+00> : vector<8x32xf32>
    %22 = tpu.matmul %15, %7, %cst_15 {dimension_numbers = #tpu.dot_dimension_numbers<[1], [0], [0], [1], [0, 0, 1, 1], [], []>} : vector<8x32xf32>, vector<32x32xf32>, vector<8x32xf32> -> vector<8x32xf32>
    %23 = arith.addf %21, %22 : vector<8x32xf32>
    %24 = math.tanh %23 : vector<8x32xf32>
    %25 = arith.index_cast %19 : i32 to index
    %c0_16 = arith.constant 0 : index
    %26 = vector.load %arg8[%25, %c0_16] : memref<64x32xf32, #tpu.memory_space<vmem>>, vector<8x32xf32>
    tpu.vector_store %arg8[%25, %c0_16], %24 {strides = array<i32>} : memref<64x32xf32, #tpu.memory_space<vmem>>, vector<8x32xf32>,
    %c2_i32 = arith.constant 2 : i32
    %c8_i32_17 = arith.constant 8 : i32
    %27 = arith.muli %c2_i32, %c8_i32_17 : i32
    %28 = tpu.assume_multiple %27, 8 : i32
    %29 = arith.index_cast %28 : i32 to index
    %c0_18 = arith.constant 0 : index
    %30 = vector.load %arg7[%29, %c0_18] : memref<64x32xf32, #tpu.memory_space<vmem>>, vector<8x32xf32>
    %cst_19 = arith.constant dense<0.000000e+00> : vector<8x32xf32>
    %31 = tpu.matmul %24, %7, %cst_19 {dimension_numbers = #tpu.dot_dimension_numbers<[1], [0], [0], [1], [0, 0, 1, 1], [], []>} : vector<8x32xf32>, vector<32x32xf32>, vector<8x32xf32> -> vector<8x32xf32>
    %32 = arith.addf %30, %31 : vector<8x32xf32>
    %33 = math.tanh %32 : vector<8x32xf32>
    %34 = arith.index_cast %28 : i32 to index
    %c0_20 = arith.constant 0 : index
    %35 = vector.load %arg8[%34, %c0_20] : memref<64x32xf32, #tpu.memory_space<vmem>>, vector<8x32xf32>
    tpu.vector_store %arg8[%34, %c0_20], %33 {strides = array<i32>} : memref<64x32xf32, #tpu.memory_space<vmem>>, vector<8x32xf32>,
    %c3_i32 = arith.constant 3 : i32
    %c8_i32_21 = arith.constant 8 : i32
    %36 = arith.muli %c3_i32, %c8_i32_21 : i32
    %37 = tpu.assume_multiple %36, 8 : i32
    %38 = arith.index_cast %37 : i32 to index
    %c0_22 = arith.constant 0 : index
    %39 = vector.load %arg7[%38, %c0_22] : memref<64x32xf32, #tpu.memory_space<vmem>>, vector<8x32xf32>
    %cst_23 = arith.constant dense<0.000000e+00> : vector<8x32xf32>
    %40 = tpu.matmul %33, %7, %cst_23 {dimension_numbers = #tpu.dot_dimension_numbers<[1], [0], [0], [1], [0, 0, 1, 1], [], []>} : vector<8x32xf32>, vector<32x32xf32>, vector<8x32xf32> -> vector<8x32xf32>
    %41 = arith.addf %39, %40 : vector<8x32xf32>
    %42 = math.tanh %41 : vector<8x32xf32>
    %43 = arith.index_cast %37 : i32 to index
    %c0_24 = arith.constant 0 : index
    %44 = vector.load %arg8[%43, %c0_24] : memref<64x32xf32, #tpu.memory_space<vmem>>, vector<8x32xf32>
    tpu.vector_store %arg8[%43, %c0_24], %42 {strides = array<i32>} : memref<64x32xf32, #tpu.memory_space<vmem>>, vector<8x32xf32>,
    %c4_i32 = arith.constant 4 : i32
    %c8_i32_25 = arith.constant 8 : i32
    %45 = arith.muli %c4_i32, %c8_i32_25 : i32
    %46 = tpu.assume_multiple %45, 8 : i32
    %47 = arith.index_cast %46 : i32 to index
    %c0_26 = arith.constant 0 : index
    %48 = vector.load %arg7[%47, %c0_26] : memref<64x32xf32, #tpu.memory_space<vmem>>, vector<8x32xf32>
    %cst_27 = arith.constant dense<0.000000e+00> : vector<8x32xf32>
    %49 = tpu.matmul %42, %7, %cst_27 {dimension_numbers = #tpu.dot_dimension_numbers<[1], [0], [0], [1], [0, 0, 1, 1], [], []>} : vector<8x32xf32>, vector<32x32xf32>, vector<8x32xf32> -> vector<8x32xf32>
    %50 = arith.addf %48, %49 : vector<8x32xf32>
    %51 = math.tanh %50 : vector<8x32xf32>
    %52 = arith.index_cast %46 : i32 to index
    %c0_28 = arith.constant 0 : index
    %53 = vector.load %arg8[%52, %c0_28] : memref<64x32xf32, #tpu.memory_space<vmem>>, vector<8x32xf32>
    tpu.vector_store %arg8[%52, %c0_28], %51 {strides = array<i32>} : memref<64x32xf32, #tpu.memory_space<vmem>>, vector<8x32xf32>,
    %c5_i32 = arith.constant 5 : i32
    %c8_i32_29 = arith.constant 8 : i32
    %54 = arith.muli %c5_i32, %c8_i32_29 : i32
    %55 = tpu.assume_multiple %54, 8 : i32
    %56 = arith.index_cast %55 : i32 to index
    %c0_30 = arith.constant 0 : index
    %57 = vector.load %arg7[%56, %c0_30] : memref<64x32xf32, #tpu.memory_space<vmem>>, vector<8x32xf32>
    %cst_31 = arith.constant dense<0.000000e+00> : vector<8x32xf32>
    %58 = tpu.matmul %51, %7, %cst_31 {dimension_numbers = #tpu.dot_dimension_numbers<[1], [0], [0], [1], [0, 0, 1, 1], [], []>} : vector<8x32xf32>, vector<32x32xf32>, vector<8x32xf32> -> vector<8x32xf32>
    %59 = arith.addf %57, %58 : vector<8x32xf32>
    %60 = math.tanh %59 : vector<8x32xf32>
    %61 = arith.index_cast %55 : i32 to index
    %c0_32 = arith.constant 0 : index
    %62 = vector.load %arg8[%61, %c0_32] : memref<64x32xf32, #tpu.memory_space<vmem>>, vector<8x32xf32>
    tpu.vector_store %arg8[%61, %c0_32], %60 {strides = array<i32>} : memref<64x32xf32, #tpu.memory_space<vmem>>, vector<8x32xf32>,
    %c6_i32 = arith.constant 6 : i32
    %c8_i32_33 = arith.constant 8 : i32
    %63 = arith.muli %c6_i32, %c8_i32_33 : i32
    %64 = tpu.assume_multiple %63, 8 : i32
    %65 = arith.index_cast %64 : i32 to index
    %c0_34 = arith.constant 0 : index
    %66 = vector.load %arg7[%65, %c0_34] : memref<64x32xf32, #tpu.memory_space<vmem>>, vector<8x32xf32>
    %cst_35 = arith.constant dense<0.000000e+00> : vector<8x32xf32>
    %67 = tpu.matmul %60, %7, %cst_35 {dimension_numbers = #tpu.dot_dimension_numbers<[1], [0], [0], [1], [0, 0, 1, 1], [], []>} : vector<8x32xf32>, vector<32x32xf32>, vector<8x32xf32> -> vector<8x32xf32>
    %68 = arith.addf %66, %67 : vector<8x32xf32>
    %69 = math.tanh %68 : vector<8x32xf32>
    %70 = arith.index_cast %64 : i32 to index
    %c0_36 = arith.constant 0 : index
    %71 = vector.load %arg8[%70, %c0_36] : memref<64x32xf32, #tpu.memory_space<vmem>>, vector<8x32xf32>
    tpu.vector_store %arg8[%70, %c0_36], %69 {strides = array<i32>} : memref<64x32xf32, #tpu.memory_space<vmem>>, vector<8x32xf32>,
    %c7_i32 = arith.constant 7 : i32
    %c8_i32_37 = arith.constant 8 : i32
    %72 = arith.muli %c7_i32, %c8_i32_37 : i32
    %73 = tpu.assume_multiple %72, 8 : i32
    %74 = arith.index_cast %73 : i32 to index
    %c0_38 = arith.constant 0 : index
    %75 = vector.load %arg7[%74, %c0_38] : memref<64x32xf32, #tpu.memory_space<vmem>>, vector<8x32xf32>
    %cst_39 = arith.constant dense<0.000000e+00> : vector<8x32xf32>
    %76 = tpu.matmul %69, %7, %cst_39 {dimension_numbers = #tpu.dot_dimension_numbers<[1], [0], [0], [1], [0, 0, 1, 1], [], []>} : vector<8x32xf32>, vector<32x32xf32>, vector<8x32xf32> -> vector<8x32xf32>
    %77 = arith.addf %75, %76 : vector<8x32xf32>
    %78 = math.tanh %77 : vector<8x32xf32>
    %79 = arith.index_cast %73 : i32 to index
    %c0_40 = arith.constant 0 : index
    %80 = vector.load %arg8[%79, %c0_40] : memref<64x32xf32, #tpu.memory_space<vmem>>, vector<8x32xf32>
    tpu.vector_store %arg8[%79, %c0_40], %78 {strides = array<i32>} : memref<64x32xf32, #tpu.memory_space<vmem>>, vector<8x32xf32>,
    %c8_i32_41 = arith.constant 8 : i32
    %c0_42 = arith.constant 0 : index
    %c0_43 = arith.constant 0 : index
    %81 = vector.load %arg8[%c0_42, %c0_43] : memref<64x32xf32, #tpu.memory_space<vmem>>, vector<64x32xf32>
    %c0_44 = arith.constant 0 : index
    %c0_45 = arith.constant 0 : index
    %82 = vector.load %arg4[%c0_44, %c0_45] : memref<32x128xf32, #tpu.memory_space<vmem>>, vector<32x128xf32>
    %cst_46 = arith.constant dense<0.000000e+00> : vector<64x128xf32>
    %83 = tpu.matmul %81, %82, %cst_46 {dimension_numbers = #tpu.dot_dimension_numbers<[1], [0], [0], [1], [0, 0, 1, 1], [], []>} : vector<64x32xf32>, vector<32x128xf32>, vector<64x128xf32> -> vector<64x128xf32>
    %c0_47 = arith.constant 0 : index
    %c0_48 = arith.constant 0 : index
    %84 = vector.load %arg5[%c0_47, %c0_48] : memref<1x128xf32, #tpu.memory_space<vmem>>, vector<1x128xf32>
    %85 = vector.broadcast %84 : vector<1x128xf32> to vector<64x128xf32>
    %86 = arith.addf %83, %85 : vector<64x128xf32>
    %cst_49 = arith.constant dense<0xFF800000> : vector<64xf32>
    %87 = vector.multi_reduction <maximumf>, %86, %cst_49 [1] : vector<64x128xf32> to vector<64xf32>
    %88 = vector.shape_cast %87 : vector<64xf32> to vector<64x1xf32>
    %89 = vector.broadcast %88 : vector<64x1xf32> to vector<64x128xf32>
    %90 = arith.subf %86, %89 : vector<64x128xf32>
    %91 = math.exp %90 : vector<64x128xf32>
    %cst_50 = arith.constant dense<0.000000e+00> : vector<64xf32>
    %92 = vector.multi_reduction <add>, %91, %cst_50 [1] : vector<64x128xf32> to vector<64xf32>
    %93 = vector.shape_cast %92 : vector<64xf32> to vector<64x1xf32>
    %94 = math.log %93 : vector<64x1xf32>
    %95 = vector.broadcast %94 : vector<64x1xf32> to vector<64x128xf32>
    %96 = arith.subf %90, %95 : vector<64x128xf32>
    %c0_51 = arith.constant 0 : index
    %c0_52 = arith.constant 0 : index
    %97 = vector.load %arg6[%c0_51, %c0_52] : memref<64x128xf32, #tpu.memory_space<vmem>>, vector<64x128xf32>
    tpu.vector_store %arg6[%c0_51, %c0_52], %96 {strides = array<i32>} : memref<64x128xf32, #tpu.memory_space<vmem>>, vector<64x128xf32>,
    return
  }
}

</mosaic_0001>

<llo_original>
// kernel: rnn_forward.1
$region0: #{rnn_forward.1}
  #allocation0 [shape = 'u32[]', space=smem, size = 0x4, offset = 0x4, fixed_abs, tag = 'smem constant byte address 0x4 - core index']
  #allocation1 [shape = 'u32[144,128]{1,0:T(1,128)}', space=vmem, size = 0x12000, scoped, tag = 'internal scratch']
  #allocation2 [shape = 'f32[64,32]{1,0:T(8,128)}', space=vmem, size = 0x8000, scoped, tag = 'scratch operand']
  #allocation3 [shape = 'f32[64,32]{1,0:T(8,128)}', space=vmem, size = 0x8000, scoped, tag = 'scratch operand']
  %s0 = inlined_call_operand.vmem [shape: f32[64,32], index: 0, kind: input, shape index: {}]
  %s1 = inlined_call_operand.vmem [shape: f32[32,32], index: 1, kind: input, shape index: {}]
  %s2 = inlined_call_operand.vmem [shape: f32[32,32], index: 2, kind: input, shape index: {}]
  %s3 = inlined_call_operand.vmem [shape: f32[1,32], index: 3, kind: input, shape index: {}]
  %s4 = inlined_call_operand.vmem [shape: f32[32,128], index: 4, kind: input, shape index: {}]
  %s5 = inlined_call_operand.vmem [shape: f32[1,128], index: 5, kind: input, shape index: {}]
  %s6 = inlined_call_operand.hbm [shape: f32[64,128], index: 6, kind: output, shape index: {}]
  %s7 = sld [smem:[#allocation0]]
  $region34: #{rnn_forward.1} parent=0
    _
  %s9 = ssub.s32 1, %s7
  %s10 = scalar_select 0, %s9, %s7
  $region1: #{rnn_forward.1} parent=0
    #allocation4 [shape = 'u8[32768]{0}', space=vmem, size = 0x8000, scoped, tag = 'output window, operand 0, single buffered']
    #allocation5 [shape = 's32[1]{0}', space=sflag, size = 0x4, scoped, tag = 'scoped memory for rnn_forward.1']
    %11 = vsyncpa [#allocation5], 0
    // Predicated region
    $region2: #{rnn_forward.1} parent=1 // pred_check
      _
    $region3: #{rnn_forward.1} parent=1 // pred_check_branch
      %13 = sbr.rel (0) target = $region5
    $region4: #{rnn_forward.1} parent=1 // pred_region
      _
    $region5: #{rnn_forward.1} parent=1 // pred_fallthru
      _
    // Predicated region
    $region6: #{rnn_forward.1} parent=1 // pred_check
      _
    $region7: #{rnn_forward.1} parent=1 // pred_check_branch
      %15 = sbr.rel (0) target = $region9
    $region8: #{rnn_forward.1} parent=1 // pred_region
      _
    $region9: #{rnn_forward.1} parent=1 // pred_fallthru
      _
    // Predicated region
    $region10: #{rnn_forward.1} parent=1 // pred_check
      _
    $region11: #{rnn_forward.1} parent=1 // pred_check_branch
      %17 = sbr.rel (0) target = $region13
    $region12: #{rnn_forward.1} parent=1 // pred_region
      _
    $region13: #{rnn_forward.1} parent=1 // pred_fallthru
      _
    // Predicated region
    $region14: #{rnn_forward.1} parent=1 // pred_check
      _
    $region15: #{rnn_forward.1} parent=1 // pred_check_branch
      %19 = sbr.rel (0) target = $region17
    $region16: #{rnn_forward.1} parent=1 // pred_region
      _
    $region17: #{rnn_forward.1} parent=1 // pred_fallthru
      _
    // Predicated region
    $region18: #{rnn_forward.1} parent=1 // pred_check
      _
    $region19: #{rnn_forward.1} parent=1 // pred_check_branch
      %21 = sbr.rel (0) target = $region21
    $region20: #{rnn_forward.1} parent=1 // pred_region
      _
    $region21: #{rnn_forward.1} parent=1 // pred_fallthru
      _
    // Predicated region
    $region22: #{rnn_forward.1} parent=1 // pred_check
      _
    $region23: #{rnn_forward.1} parent=1 // pred_check_branch
      %23 = sbr.rel (0) target = $region25
    $region24: #{rnn_forward.1} parent=1 // pred_region
      _
    $region25: #{rnn_forward.1} parent=1 // pred_fallthru
      _
    %v24 = vld [vmem:[%s0] sm:$0xff]
    %v25 = vld [vmem:[%s0 + $0x8] sm:$0xff]
    %v26 = vld [vmem:[%s0 + $0x10] sm:$0xff]
    %v27 = vld [vmem:[%s0 + $0x18] sm:$0xff]
    %v28 = vld [vmem:[%s0 + $0x20] sm:$0xff]
    %v29 = vld [vmem:[%s0 + $0x28] sm:$0xff]
    %v30 = vld [vmem:[%s0 + $0x30] sm:$0xff]
    %v31 = vld [vmem:[%s0 + $0x38] sm:$0xff]
    %v32 = vld [vmem:[%s1] sm:$0xff]
    %v33 = vld [vmem:[%s1 + $0x8] sm:$0xff]
    %v34 = vld [vmem:[%s1 + $0x10] sm:$0xff]
    %v35 = vld [vmem:[%s1 + $0x18] sm:$0xff]
    %v36 = vld [vmem:[%s3] sm:$0x1]
    %v38 = vlaneseq
    %v39 = vshrl.u32 %v38, 7
    %v40 = vsub.s32 0, %v39
    %v41 = vrot.slane %v36, %v40
    %vm43 = vcmask 261120
    %v45 = vsel %vm43, %v24, 0
    %v48 = vsel %vm43, %v25, 0
    %v51 = vsel %vm43, %v26, 0
    %v54 = vsel %vm43, %v27, 0
    %v57 = vsel %vm43, %v28, 0
    %v60 = vsel %vm43, %v29, 0
    %v63 = vsel %vm43, %v30, 0
    %v66 = vsel %vm43, %v31, 0
    %68 = vmatprep.subr.mxu0 0.0
    %69 = vmatpush1.msra.mxu0 %v32
    %70 = vmatprep.subr.mxu0 0.0
    %71 = vmatpush1.msra.mxu0 %v33
    %72 = vmatprep.subr.mxu0 0.0
    %73 = vmatpush1.msra.mxu0 %v34
    %74 = vmatprep.subr.mxu0 0.0
    %75 = vmatpush1.msra.mxu0 %v35
    %76 = vmatprep.subr.mxu0 0.0
    %77 = vmatpush1.msra.mxu0 0.0
    %78 = vmatprep.subr.mxu0 0.0
    %79 = vmatpush1.msra.mxu0 0.0
    %80 = vmatprep.subr.mxu0 0.0
    %81 = vmatpush1.msra.mxu0 0.0
    %82 = vmatprep.subr.mxu0 0.0
    %83 = vmatpush1.msra.mxu0 0.0
    %84 = vmatprep.subr.mxu0 0.0
    %85 = vmatpush1.msra.mxu0 0.0
    %86 = vmatprep.subr.mxu0 0.0
    %87 = vmatpush1.msra.mxu0 0.0
    %88 = vmatprep.subr.mxu0 0.0
    %89 = vmatpush1.msra.mxu0 0.0
    %90 = vmatprep.subr.mxu0 0.0
    %91 = vmatpush1.msra.mxu0 0.0
    %92 = vmatprep.subr.mxu0 0.0
    %93 = vmatpush1.msra.mxu0 0.0
    %94 = vmatprep.subr.mxu0 0.0
    %95 = vmatpush1.msra.mxu0 0.0
    %96 = vmatprep.subr.mxu0 0.0
    %97 = vmatpush1.msra.mxu0 0.0
    %98 = vmatprep.subr.mxu0 0.0
    %99 = vmatpush1.msra.mxu0 0.0
    %100 = vmatprep.subr.mxu0 0.0
    %101 = vmatpush1.msra.mxu0 0.0
    %102 = vmatprep.subr.mxu0 0.0
    %103 = vmatpush1.msra.mxu0 0.0
    %104 = vmatprep.subr.mxu0 0.0
    %105 = vmatpush1.msra.mxu0 0.0
    %106 = vmatprep.subr.mxu0 0.0
    %107 = vmatpush1.msra.mxu0 0.0
    %108 = vmatprep.subr.mxu0 0.0
    %109 = vmatpush1.msra.mxu0 0.0
    %110 = vmatprep.subr.mxu0 0.0
    %111 = vmatpush1.msra.mxu0 0.0
    %112 = vmatprep.subr.mxu0 0.0
    %113 = vmatpush1.msra.mxu0 0.0
    %114 = vmatprep.subr.mxu0 0.0
    %115 = vmatpush1.msra.mxu0 0.0
    %116 = vmatprep.subr.mxu0 0.0
    %117 = vmatpush1.msra.mxu0 0.0
    %118 = vmatprep.subr.mxu0 0.0
    %119 = vmatpush1.msra.mxu0 0.0
    %120 = vmatprep.subr.mxu0 0.0
    %121 = vmatpush1.msra.mxu0 0.0
    %122 = vmatprep.subr.mxu0 0.0
    %123 = vmatpush1.msra.mxu0 0.0
    %124 = vmatprep.subr.mxu0 0.0
    %125 = vmatpush1.msra.mxu0 0.0
    %126 = vmatprep.subr.mxu0 0.0
    %127 = vmatpush1.msra.mxu0 0.0
    %128 = vmatprep.subr.mxu0 0.0
    %129 = vmatpush1.msra.mxu0 0.0
    %130 = vmatprep.subr.mxu0 0.0
    %131 = vmatpush1.msra.mxu0 0.0
    %132 = vmatprep.mubr.f32.mxu0 0.0
    %133 = vmatmul.mubr.f32.gmra.mrb[0].mxu0 %v45
    %v134 = vpop.f32.mrb[0].mxu0
    %v135 = vadd.f32 %v41, %v134
    %v136 = vpop.f32.mrb[0].mxu0
    %137 = vmatprep.mubr.f32.mxu0 0.0
    %138 = vmatmul.mubr.f32.gmra.mrb[0].mxu0 %v48
    %v139 = vpop.f32.mrb[0].mxu0
    %v140 = vadd.f32 %v41, %v139
    %v141 = vpop.f32.mrb[0].mxu0
    %142 = vmatprep.mubr.f32.mxu0 0.0
    %143 = vmatmul.mubr.f32.gmra.mrb[0].mxu0 %v51
    %v144 = vpop.f32.mrb[0].mxu0
    %v145 = vadd.f32 %v41, %v144
    %v146 = vpop.f32.mrb[0].mxu0
    %147 = vmatprep.mubr.f32.mxu0 0.0
    %148 = vmatmul.mubr.f32.gmra.mrb[0].mxu0 %v54
    %v149 = vpop.f32.mrb[0].mxu0
    %v150 = vadd.f32 %v41, %v149
    %v151 = vpop.f32.mrb[0].mxu0
    %152 = vmatprep.mubr.f32.mxu0 0.0
    %153 = vmatmul.mubr.f32.gmra.mrb[0].mxu0 %v57
    %v154 = vpop.f32.mrb[0].mxu0
    %v155 = vadd.f32 %v41, %v154
    %v156 = vpop.f32.mrb[0].mxu0
    %157 = vmatprep.mubr.f32.mxu0 0.0
    %158 = vmatmul.mubr.f32.gmra.mrb[0].mxu0 %v60
    %v159 = vpop.f32.mrb[0].mxu0
    %v160 = vadd.f32 %v41, %v159
    %v161 = vpop.f32.mrb[0].mxu0
    %162 = vmatprep.mubr.f32.mxu0 0.0
    %163 = vmatmul.mubr.f32.gmra.mrb[0].mxu0 %v63
    %v164 = vpop.f32.mrb[0].mxu0
    %v165 = vadd.f32 %v41, %v164
    %v166 = vpop.f32.mrb[0].mxu0
    %167 = vmatprep.mubr.f32.mxu0 0.0
    %168 = vmatmul.mubr.f32.gmra.mrb[0].mxu0 %v66
    %v169 = vpop.f32.mrb[0].mxu0
    %v170 = vadd.f32 %v41, %v169
    %v171 = vpop.f32.mrb[0].mxu0
    %172 = vdwg.mxu0
    %173 = vst.msk [vmem:[#allocation2] sm:$0xff] %vm43, %v135
    %174 = vst.msk [vmem:[#allocation2 + $0x8] sm:$0xff] %vm43, %v140
    %175 = vst.msk [vmem:[#allocation2 + $0x10] sm:$0xff] %vm43, %v145
    %176 = vst.msk [vmem:[#allocation2 + $0x18] sm:$0xff] %vm43, %v150
    %177 = vst.msk [vmem:[#allocation2 + $0x20] sm:$0xff] %vm43, %v155
    %178 = vst.msk [vmem:[#allocation2 + $0x28] sm:$0xff] %vm43, %v160
    %179 = vst.msk [vmem:[#allocation2 + $0x30] sm:$0xff] %vm43, %v165
    %180 = vst.msk [vmem:[#allocation2 + $0x38] sm:$0xff] %vm43, %v170
    %v181 = vld [vmem:[%s2] sm:$0xff]
    %v182 = vld [vmem:[%s2 + $0x8] sm:$0xff]
    %v183 = vld [vmem:[%s2 + $0x10] sm:$0xff]
    %v184 = vld [vmem:[%s2 + $0x18] sm:$0xff]
    %v185 = vld [vmem:[#allocation2] sm:$0xff]
    %v187 = vsel %vm43, 0.0, 0
    %189 = vmatprep.subr.mxu0 0.0
    %190 = vmatpush1.msra.mxu0 %v181
    %191 = vmatprep.subr.mxu0 0.0
    %192 = vmatpush1.msra.mxu0 %v182
    %193 = vmatprep.subr.mxu0 0.0
    %194 = vmatpush1.msra.mxu0 %v183
    %195 = vmatprep.subr.mxu0 0.0
    %196 = vmatpush1.msra.mxu0 %v184
    %197 = vmatprep.subr.mxu0 0.0
    %198 = vmatpush1.msra.mxu0 0.0
    %199 = vmatprep.subr.mxu0 0.0
    %200 = vmatpush1.msra.mxu0 0.0
    %201 = vmatprep.subr.mxu0 0.0
    %202 = vmatpush1.msra.mxu0 0.0
    %203 = vmatprep.subr.mxu0 0.0
    %204 = vmatpush1.msra.mxu0 0.0
    %205 = vmatprep.subr.mxu0 0.0
    %206 = vmatpush1.msra.mxu0 0.0
    %207 = vmatprep.subr.mxu0 0.0
    %208 = vmatpush1.msra.mxu0 0.0
    %209 = vmatprep.subr.mxu0 0.0
    %210 = vmatpush1.msra.mxu0 0.0
    %211 = vmatprep.subr.mxu0 0.0
    %212 = vmatpush1.msra.mxu0 0.0
    %213 = vmatprep.subr.mxu0 0.0
    %214 = vmatpush1.msra.mxu0 0.0
    %215 = vmatprep.subr.mxu0 0.0
    %216 = vmatpush1.msra.mxu0 0.0
    %217 = vmatprep.subr.mxu0 0.0
    %218 = vmatpush1.msra.mxu0 0.0
    %219 = vmatprep.subr.mxu0 0.0
    %220 = vmatpush1.msra.mxu0 0.0
    %221 = vmatprep.subr.mxu0 0.0
    %222 = vmatpush1.msra.mxu0 0.0
    %223 = vmatprep.subr.mxu0 0.0
    %224 = vmatpush1.msra.mxu0 0.0
    %225 = vmatprep.subr.mxu0 0.0
    %226 = vmatpush1.msra.mxu0 0.0
    %227 = vmatprep.subr.mxu0 0.0
    %228 = vmatpush1.msra.mxu0 0.0
    %229 = vmatprep.subr.mxu0 0.0
    %230 = vmatpush1.msra.mxu0 0.0
    %231 = vmatprep.subr.mxu0 0.0
    %232 = vmatpush1.msra.mxu0 0.0
    %233 = vmatprep.subr.mxu0 0.0
    %234 = vmatpush1.msra.mxu0 0.0
    %235 = vmatprep.subr.mxu0 0.0
    %236 = vmatpush1.msra.mxu0 0.0
    %237 = vmatprep.subr.mxu0 0.0
    %238 = vmatpush1.msra.mxu0 0.0
    %239 = vmatprep.subr.mxu0 0.0
    %240 = vmatpush1.msra.mxu0 0.0
    %241 = vmatprep.subr.mxu0 0.0
    %242 = vmatpush1.msra.mxu0 0.0
    %243 = vmatprep.subr.mxu0 0.0
    %244 = vmatpush1.msra.mxu0 0.0
    %245 = vmatprep.subr.mxu0 0.0
    %246 = vmatpush1.msra.mxu0 0.0
    %247 = vmatprep.subr.mxu0 0.0
    %248 = vmatpush1.msra.mxu0 0.0
    %249 = vmatprep.subr.mxu0 0.0
    %250 = vmatpush1.msra.mxu0 0.0
    %251 = vmatprep.subr.mxu0 0.0
    %252 = vmatpush1.msra.mxu0 0.0
    %253 = vmatprep.mubr.f32.mxu0 0.0
    %254 = vmatmul.mubr.f32.gmra.mrb[0].mxu0 %v187
    %v255 = vpop.f32.mrb[0].mxu0
    %v256 = vadd.f32 0.0, %v255
    %v257 = vpop.f32.mrb[0].mxu0
    %258 = vdwg.mxu0
    %v259 = vadd.f32 %v185, %v256
    %v260 = vtanh.pop %v259
    %261 = vst.msk [vmem:[#allocation3] sm:$0xff] %vm43, %v260
    %s262 = scalar_lea.vmem [#allocation2], 8
    %v263 = vld [vmem:[%s262] sm:$0xff]
    %v265 = vsel %vm43, %v260, 0
    %267 = vmatprep.subr.mxu0 0.0
    %268 = vmatpush1.msra.mxu0 %v181
    %269 = vmatprep.subr.mxu0 0.0
    %270 = vmatpush1.msra.mxu0 %v182
    %271 = vmatprep.subr.mxu0 0.0
    %272 = vmatpush1.msra.mxu0 %v183
    %273 = vmatprep.subr.mxu0 0.0
    %274 = vmatpush1.msra.mxu0 %v184
    %275 = vmatprep.subr.mxu0 0.0
    %276 = vmatpush1.msra.mxu0 0.0
    %277 = vmatprep.subr.mxu0 0.0
    %278 = vmatpush1.msra.mxu0 0.0
    %279 = vmatprep.subr.mxu0 0.0
    %280 = vmatpush1.msra.mxu0 0.0
    %281 = vmatprep.subr.mxu0 0.0
    %282 = vmatpush1.msra.mxu0 0.0
    %283 = vmatprep.subr.mxu0 0.0
    %284 = vmatpush1.msra.mxu0 0.0
    %285 = vmatprep.subr.mxu0 0.0
    %286 = vmatpush1.msra.mxu0 0.0
    %287 = vmatprep.subr.mxu0 0.0
    %288 = vmatpush1.msra.mxu0 0.0
    %289 = vmatprep.subr.mxu0 0.0
    %290 = vmatpush1.msra.mxu0 0.0
    %291 = vmatprep.subr.mxu0 0.0
    %292 = vmatpush1.msra.mxu0 0.0
    %293 = vmatprep.subr.mxu0 0.0
    %294 = vmatpush1.msra.mxu0 0.0
    %295 = vmatprep.subr.mxu0 0.0
    %296 = vmatpush1.msra.mxu0 0.0
    %297 = vmatprep.subr.mxu0 0.0
    %298 = vmatpush1.msra.mxu0 0.0
    %299 = vmatprep.subr.mxu0 0.0
    %300 = vmatpush1.msra.mxu0 0.0
    %301 = vmatprep.subr.mxu0 0.0
    %302 = vmatpush1.msra.mxu0 0.0
    %303 = vmatprep.subr.mxu0 0.0
    %304 = vmatpush1.msra.mxu0 0.0
    %305 = vmatprep.subr.mxu0 0.0
    %306 = vmatpush1.msra.mxu0 0.0
    %307 = vmatprep.subr.mxu0 0.0
    %308 = vmatpush1.msra.mxu0 0.0
    %309 = vmatprep.subr.mxu0 0.0
    %310 = vmatpush1.msra.mxu0 0.0
    %311 = vmatprep.subr.mxu0 0.0
    %312 = vmatpush1.msra.mxu0 0.0
    %313 = vmatprep.subr.mxu0 0.0
    %314 = vmatpush1.msra.mxu0 0.0
    %315 = vmatprep.subr.mxu0 0.0
    %316 = vmatpush1.msra.mxu0 0.0
    %317 = vmatprep.subr.mxu0 0.0
    %318 = vmatpush1.msra.mxu0 0.0
    %319 = vmatprep.subr.mxu0 0.0
    %320 = vmatpush1.msra.mxu0 0.0
    %321 = vmatprep.subr.mxu0 0.0
    %322 = vmatpush1.msra.mxu0 0.0
    %323 = vmatprep.subr.mxu0 0.0
    %324 = vmatpush1.msra.mxu0 0.0
    %325 = vmatprep.subr.mxu0 0.0
    %326 = vmatpush1.msra.mxu0 0.0
    %327 = vmatprep.subr.mxu0 0.0
    %328 = vmatpush1.msra.mxu0 0.0
    %329 = vmatprep.subr.mxu0 0.0
    %330 = vmatpush1.msra.mxu0 0.0
    %331 = vmatprep.mubr.f32.mxu0 0.0
    %332 = vmatmul.mubr.f32.gmra.mrb[0].mxu0 %v265
    %v333 = vpop.f32.mrb[0].mxu0
    %v334 = vadd.f32 0.0, %v333
    %v335 = vpop.f32.mrb[0].mxu0
    %336 = vdwg.mxu0
    %v337 = vadd.f32 %v263, %v334
    %v338 = vtanh.pop %v337
    %s339 = scalar_lea.vmem [#allocation3], 8
    %340 = vst.msk [vmem:[%s339] sm:$0xff] %vm43, %v338
    %s341 = scalar_lea.vmem [#allocation2], 16
    %v342 = vld [vmem:[%s341] sm:$0xff]
    %v344 = vsel %vm43, %v338, 0
    %346 = vmatprep.subr.mxu0 0.0
    %347 = vmatpush1.msra.mxu0 %v181
    %348 = vmatprep.subr.mxu0 0.0
    %349 = vmatpush1.msra.mxu0 %v182
    %350 = vmatprep.subr.mxu0 0.0
    %351 = vmatpush1.msra.mxu0 %v183
    %352 = vmatprep.subr.mxu0 0.0
    %353 = vmatpush1.msra.mxu0 %v184
    %354 = vmatprep.subr.mxu0 0.0
    %355 = vmatpush1.msra.mxu0 0.0
    %356 = vmatprep.subr.mxu0 0.0
    %357 = vmatpush1.msra.mxu0 0.0
    %358 = vmatprep.subr.mxu0 0.0
    %359 = vmatpush1.msra.mxu0 0.0
    %360 = vmatprep.subr.mxu0 0.0
    %361 = vmatpush1.msra.mxu0 0.0
    %362 = vmatprep.subr.mxu0 0.0
    %363 = vmatpush1.msra.mxu0 0.0
    %364 = vmatprep.subr.mxu0 0.0
    %365 = vmatpush1.msra.mxu0 0.0
    %366 = vmatprep.subr.mxu0 0.0
    %367 = vmatpush1.msra.mxu0 0.0
    %368 = vmatprep.subr.mxu0 0.0
    %369 = vmatpush1.msra.mxu0 0.0
    %370 = vmatprep.subr.mxu0 0.0
    %371 = vmatpush1.msra.mxu0 0.0
    %372 = vmatprep.subr.mxu0 0.0
    %373 = vmatpush1.msra.mxu0 0.0
    %374 = vmatprep.subr.mxu0 0.0
    %375 = vmatpush1.msra.mxu0 0.0
    %376 = vmatprep.subr.mxu0 0.0
    %377 = vmatpush1.msra.mxu0 0.0
    %378 = vmatprep.subr.mxu0 0.0
    %379 = vmatpush1.msra.mxu0 0.0
    %380 = vmatprep.subr.mxu0 0.0
    %381 = vmatpush1.msra.mxu0 0.0
    %382 = vmatprep.subr.mxu0 0.0
    %383 = vmatpush1.msra.mxu0 0.0
    %384 = vmatprep.subr.mxu0 0.0
    %385 = vmatpush1.msra.mxu0 0.0
    %386 = vmatprep.subr.mxu0 0.0
    %387 = vmatpush1.msra.mxu0 0.0
    %388 = vmatprep.subr.mxu0 0.0
    %389 = vmatpush1.msra.mxu0 0.0
    %390 = vmatprep.subr.mxu0 0.0
    %391 = vmatpush1.msra.mxu0 0.0
    %392 = vmatprep.subr.mxu0 0.0
    %393 = vmatpush1.msra.mxu0 0.0
    %394 = vmatprep.subr.mxu0 0.0
    %395 = vmatpush1.msra.mxu0 0.0
    %396 = vmatprep.subr.mxu0 0.0
    %397 = vmatpush1.msra.mxu0 0.0
    %398 = vmatprep.subr.mxu0 0.0
    %399 = vmatpush1.msra.mxu0 0.0
    %400 = vmatprep.subr.mxu0 0.0
    %401 = vmatpush1.msra.mxu0 0.0
    %402 = vmatprep.subr.mxu0 0.0
    %403 = vmatpush1.msra.mxu0 0.0
    %404 = vmatprep.subr.mxu0 0.0
    %405 = vmatpush1.msra.mxu0 0.0
    %406 = vmatprep.subr.mxu0 0.0
    %407 = vmatpush1.msra.mxu0 0.0
    %408 = vmatprep.subr.mxu0 0.0
    %409 = vmatpush1.msra.mxu0 0.0
    %410 = vmatprep.mubr.f32.mxu0 0.0
    %411 = vmatmul.mubr.f32.gmra.mrb[0].mxu0 %v344
    %v412 = vpop.f32.mrb[0].mxu0
    %v413 = vadd.f32 0.0, %v412
    %v414 = vpop.f32.mrb[0].mxu0
    %415 = vdwg.mxu0
    %v416 = vadd.f32 %v342, %v413
    %v417 = vtanh.pop %v416
    %s418 = scalar_lea.vmem [#allocation3], 16
    %419 = vst.msk [vmem:[%s418] sm:$0xff] %vm43, %v417
    %s420 = scalar_lea.vmem [#allocation2], 24
    %v421 = vld [vmem:[%s420] sm:$0xff]
    %v423 = vsel %vm43, %v417, 0
    %425 = vmatprep.subr.mxu0 0.0
    %426 = vmatpush1.msra.mxu0 %v181
    %427 = vmatprep.subr.mxu0 0.0
    %428 = vmatpush1.msra.mxu0 %v182
    %429 = vmatprep.subr.mxu0 0.0
    %430 = vmatpush1.msra.mxu0 %v183
    %431 = vmatprep.subr.mxu0 0.0
    %432 = vmatpush1.msra.mxu0 %v184
    %433 = vmatprep.subr.mxu0 0.0
    %434 = vmatpush1.msra.mxu0 0.0
    %435 = vmatprep.subr.mxu0 0.0
    %436 = vmatpush1.msra.mxu0 0.0
    %437 = vmatprep.subr.mxu0 0.0
    %438 = vmatpush1.msra.mxu0 0.0
    %439 = vmatprep.subr.mxu0 0.0
    %440 = vmatpush1.msra.mxu0 0.0
    %441 = vmatprep.subr.mxu0 0.0
    %442 = vmatpush1.msra.mxu0 0.0
    %443 = vmatprep.subr.mxu0 0.0
    %444 = vmatpush1.msra.mxu0 0.0
    %445 = vmatprep.subr.mxu0 0.0
    %446 = vmatpush1.msra.mxu0 0.0
    %447 = vmatprep.subr.mxu0 0.0
    %448 = vmatpush1.msra.mxu0 0.0
    %449 = vmatprep.subr.mxu0 0.0
    %450 = vmatpush1.msra.mxu0 0.0
    %451 = vmatprep.subr.mxu0 0.0
    %452 = vmatpush1.msra.mxu0 0.0
    %453 = vmatprep.subr.mxu0 0.0
    %454 = vmatpush1.msra.mxu0 0.0
    %455 = vmatprep.subr.mxu0 0.0
    %456 = vmatpush1.msra.mxu0 0.0
    %457 = vmatprep.subr.mxu0 0.0
    %458 = vmatpush1.msra.mxu0 0.0
    %459 = vmatprep.subr.mxu0 0.0
    %460 = vmatpush1.msra.mxu0 0.0
    %461 = vmatprep.subr.mxu0 0.0
    %462 = vmatpush1.msra.mxu0 0.0
    %463 = vmatprep.subr.mxu0 0.0
    %464 = vmatpush1.msra.mxu0 0.0
    %465 = vmatprep.subr.mxu0 0.0
    %466 = vmatpush1.msra.mxu0 0.0
    %467 = vmatprep.subr.mxu0 0.0
    %468 = vmatpush1.msra.mxu0 0.0
    %469 = vmatprep.subr.mxu0 0.0
    %470 = vmatpush1.msra.mxu0 0.0
    %471 = vmatprep.subr.mxu0 0.0
    %472 = vmatpush1.msra.mxu0 0.0
    %473 = vmatprep.subr.mxu0 0.0
    %474 = vmatpush1.msra.mxu0 0.0
    %475 = vmatprep.subr.mxu0 0.0
    %476 = vmatpush1.msra.mxu0 0.0
    %477 = vmatprep.subr.mxu0 0.0
    %478 = vmatpush1.msra.mxu0 0.0
    %479 = vmatprep.subr.mxu0 0.0
    %480 = vmatpush1.msra.mxu0 0.0
    %481 = vmatprep.subr.mxu0 0.0
    %482 = vmatpush1.msra.mxu0 0.0
    %483 = vmatprep.subr.mxu0 0.0
    %484 = vmatpush1.msra.mxu0 0.0
    %485 = vmatprep.subr.mxu0 0.0
    %486 = vmatpush1.msra.mxu0 0.0
    %487 = vmatprep.subr.mxu0 0.0
    %488 = vmatpush1.msra.mxu0 0.0
    %489 = vmatprep.mubr.f32.mxu0 0.0
    %490 = vmatmul.mubr.f32.gmra.mrb[0].mxu0 %v423
    %v491 = vpop.f32.mrb[0].mxu0
    %v492 = vadd.f32 0.0, %v491
    %v493 = vpop.f32.mrb[0].mxu0
    %494 = vdwg.mxu0
    %v495 = vadd.f32 %v421, %v492
    %v496 = vtanh.pop %v495
    %s497 = scalar_lea.vmem [#allocation3], 24
    %498 = vst.msk [vmem:[%s497] sm:$0xff] %vm43, %v496
    %s499 = scalar_lea.vmem [#allocation2], 32
    %v500 = vld [vmem:[%s499] sm:$0xff]
    %v502 = vsel %vm43, %v496, 0
    %504 = vmatprep.subr.mxu0 0.0
    %505 = vmatpush1.msra.mxu0 %v181
    %506 = vmatprep.subr.mxu0 0.0
    %507 = vmatpush1.msra.mxu0 %v182
    %508 = vmatprep.subr.mxu0 0.0
    %509 = vmatpush1.msra.mxu0 %v183
    %510 = vmatprep.subr.mxu0 0.0
    %511 = vmatpush1.msra.mxu0 %v184
    %512 = vmatprep.subr.mxu0 0.0
    %513 = vmatpush1.msra.mxu0 0.0
    %514 = vmatprep.subr.mxu0 0.0
    %515 = vmatpush1.msra.mxu0 0.0
    %516 = vmatprep.subr.mxu0 0.0
    %517 = vmatpush1.msra.mxu0 0.0
    %518 = vmatprep.subr.mxu0 0.0
    %519 = vmatpush1.msra.mxu0 0.0
    %520 = vmatprep.subr.mxu0 0.0
    %521 = vmatpush1.msra.mxu0 0.0
    %522 = vmatprep.subr.mxu0 0.0
    %523 = vmatpush1.msra.mxu0 0.0
    %524 = vmatprep.subr.mxu0 0.0
    %525 = vmatpush1.msra.mxu0 0.0
    %526 = vmatprep.subr.mxu0 0.0
    %527 = vmatpush1.msra.mxu0 0.0
    %528 = vmatprep.subr.mxu0 0.0
    %529 = vmatpush1.msra.mxu0 0.0
    %530 = vmatprep.subr.mxu0 0.0
    %531 = vmatpush1.msra.mxu0 0.0
    %532 = vmatprep.subr.mxu0 0.0
    %533 = vmatpush1.msra.mxu0 0.0
    %534 = vmatprep.subr.mxu0 0.0
    %535 = vmatpush1.msra.mxu0 0.0
    %536 = vmatprep.subr.mxu0 0.0
    %537 = vmatpush1.msra.mxu0 0.0
    %538 = vmatprep.subr.mxu0 0.0
    %539 = vmatpush1.msra.mxu0 0.0
    %540 = vmatprep.subr.mxu0 0.0
    %541 = vmatpush1.msra.mxu0 0.0
    %542 = vmatprep.subr.mxu0 0.0
    %543 = vmatpush1.msra.mxu0 0.0
    %544 = vmatprep.subr.mxu0 0.0
    %545 = vmatpush1.msra.mxu0 0.0
    %546 = vmatprep.subr.mxu0 0.0
    %547 = vmatpush1.msra.mxu0 0.0
    %548 = vmatprep.subr.mxu0 0.0
    %549 = vmatpush1.msra.mxu0 0.0
    %550 = vmatprep.subr.mxu0 0.0
    %551 = vmatpush1.msra.mxu0 0.0
    %552 = vmatprep.subr.mxu0 0.0
    %553 = vmatpush1.msra.mxu0 0.0
    %554 = vmatprep.subr.mxu0 0.0
    %555 = vmatpush1.msra.mxu0 0.0
    %556 = vmatprep.subr.mxu0 0.0
    %557 = vmatpush1.msra.mxu0 0.0
    %558 = vmatprep.subr.mxu0 0.0
    %559 = vmatpush1.msra.mxu0 0.0
    %560 = vmatprep.subr.mxu0 0.0
    %561 = vmatpush1.msra.mxu0 0.0
    %562 = vmatprep.subr.mxu0 0.0
    %563 = vmatpush1.msra.mxu0 0.0
    %564 = vmatprep.subr.mxu0 0.0
    %565 = vmatpush1.msra.mxu0 0.0
    %566 = vmatprep.subr.mxu0 0.0
    %567 = vmatpush1.msra.mxu0 0.0
    %568 = vmatprep.mubr.f32.mxu0 0.0
    %569 = vmatmul.mubr.f32.gmra.mrb[0].mxu0 %v502
    %v570 = vpop.f32.mrb[0].mxu0
    %v571 = vadd.f32 0.0, %v570
    %v572 = vpop.f32.mrb[0].mxu0
    %573 = vdwg.mxu0
    %v574 = vadd.f32 %v500, %v571
    %v575 = vtanh.pop %v574
    %s576 = scalar_lea.vmem [#allocation3], 32
    %577 = vst.msk [vmem:[%s576] sm:$0xff] %vm43, %v575
    %s578 = scalar_lea.vmem [#allocation2], 40
    %v579 = vld [vmem:[%s578] sm:$0xff]
    %v581 = vsel %vm43, %v575, 0
    %583 = vmatprep.subr.mxu0 0.0
    %584 = vmatpush1.msra.mxu0 %v181
    %585 = vmatprep.subr.mxu0 0.0
    %586 = vmatpush1.msra.mxu0 %v182
    %587 = vmatprep.subr.mxu0 0.0
    %588 = vmatpush1.msra.mxu0 %v183
    %589 = vmatprep.subr.mxu0 0.0
    %590 = vmatpush1.msra.mxu0 %v184
    %591 = vmatprep.subr.mxu0 0.0
    %592 = vmatpush1.msra.mxu0 0.0
    %593 = vmatprep.subr.mxu0 0.0
    %594 = vmatpush1.msra.mxu0 0.0
    %595 = vmatprep.subr.mxu0 0.0
    %596 = vmatpush1.msra.mxu0 0.0
    %597 = vmatprep.subr.mxu0 0.0
    %598 = vmatpush1.msra.mxu0 0.0
    %599 = vmatprep.subr.mxu0 0.0
    %600 = vmatpush1.msra.mxu0 0.0
    %601 = vmatprep.subr.mxu0 0.0
    %602 = vmatpush1.msra.mxu0 0.0
    %603 = vmatprep.subr.mxu0 0.0
    %604 = vmatpush1.msra.mxu0 0.0
    %605 = vmatprep.subr.mxu0 0.0
    %606 = vmatpush1.msra.mxu0 0.0
    %607 = vmatprep.subr.mxu0 0.0
    %608 = vmatpush1.msra.mxu0 0.0
    %609 = vmatprep.subr.mxu0 0.0
    %610 = vmatpush1.msra.mxu0 0.0
    %611 = vmatprep.subr.mxu0 0.0
    %612 = vmatpush1.msra.mxu0 0.0
    %613 = vmatprep.subr.mxu0 0.0
    %614 = vmatpush1.msra.mxu0 0.0
    %615 = vmatprep.subr.mxu0 0.0
    %616 = vmatpush1.msra.mxu0 0.0
    %617 = vmatprep.subr.mxu0 0.0
    %618 = vmatpush1.msra.mxu0 0.0
    %619 = vmatprep.subr.mxu0 0.0
    %620 = vmatpush1.msra.mxu0 0.0
    %621 = vmatprep.subr.mxu0 0.0
    %622 = vmatpush1.msra.mxu0 0.0
    %623 = vmatprep.subr.mxu0 0.0
    %624 = vmatpush1.msra.mxu0 0.0
    %625 = vmatprep.subr.mxu0 0.0
    %626 = vmatpush1.msra.mxu0 0.0
    %627 = vmatprep.subr.mxu0 0.0
    %628 = vmatpush1.msra.mxu0 0.0
    %629 = vmatprep.subr.mxu0 0.0
    %630 = vmatpush1.msra.mxu0 0.0
    %631 = vmatprep.subr.mxu0 0.0
    %632 = vmatpush1.msra.mxu0 0.0
    %633 = vmatprep.subr.mxu0 0.0
    %634 = vmatpush1.msra.mxu0 0.0
    %635 = vmatprep.subr.mxu0 0.0
    %636 = vmatpush1.msra.mxu0 0.0
    %637 = vmatprep.subr.mxu0 0.0
    %638 = vmatpush1.msra.mxu0 0.0
    %639 = vmatprep.subr.mxu0 0.0
    %640 = vmatpush1.msra.mxu0 0.0
    %641 = vmatprep.subr.mxu0 0.0
    %642 = vmatpush1.msra.mxu0 0.0
    %643 = vmatprep.subr.mxu0 0.0
    %644 = vmatpush1.msra.mxu0 0.0
    %645 = vmatprep.subr.mxu0 0.0
    %646 = vmatpush1.msra.mxu0 0.0
    %647 = vmatprep.mubr.f32.mxu0 0.0
    %648 = vmatmul.mubr.f32.gmra.mrb[0].mxu0 %v581
    %v649 = vpop.f32.mrb[0].mxu0
    %v650 = vadd.f32 0.0, %v649
    %v651 = vpop.f32.mrb[0].mxu0
    %652 = vdwg.mxu0
    %v653 = vadd.f32 %v579, %v650
    %v654 = vtanh.pop %v653
    %s655 = scalar_lea.vmem [#allocation3], 40
    %656 = vst.msk [vmem:[%s655] sm:$0xff] %vm43, %v654
    %s657 = scalar_lea.vmem [#allocation2], 48
    %v658 = vld [vmem:[%s657] sm:$0xff]
    %v660 = vsel %vm43, %v654, 0
    %662 = vmatprep.subr.mxu0 0.0
    %663 = vmatpush1.msra.mxu0 %v181
    %664 = vmatprep.subr.mxu0 0.0
    %665 = vmatpush1.msra.mxu0 %v182
    %666 = vmatprep.subr.mxu0 0.0
    %667 = vmatpush1.msra.mxu0 %v183
    %668 = vmatprep.subr.mxu0 0.0
    %669 = vmatpush1.msra.mxu0 %v184
    %670 = vmatprep.subr.mxu0 0.0
    %671 = vmatpush1.msra.mxu0 0.0
    %672 = vmatprep.subr.mxu0 0.0
    %673 = vmatpush1.msra.mxu0 0.0
    %674 = vmatprep.subr.mxu0 0.0
    %675 = vmatpush1.msra.mxu0 0.0
    %676 = vmatprep.subr.mxu0 0.0
    %677 = vmatpush1.msra.mxu0 0.0
    %678 = vmatprep.subr.mxu0 0.0
    %679 = vmatpush1.msra.mxu0 0.0
    %680 = vmatprep.subr.mxu0 0.0
    %681 = vmatpush1.msra.mxu0 0.0
    %682 = vmatprep.subr.mxu0 0.0
    %683 = vmatpush1.msra.mxu0 0.0
    %684 = vmatprep.subr.mxu0 0.0
    %685 = vmatpush1.msra.mxu0 0.0
    %686 = vmatprep.subr.mxu0 0.0
    %687 = vmatpush1.msra.mxu0 0.0
    %688 = vmatprep.subr.mxu0 0.0
    %689 = vmatpush1.msra.mxu0 0.0
    %690 = vmatprep.subr.mxu0 0.0
    %691 = vmatpush1.msra.mxu0 0.0
    %692 = vmatprep.subr.mxu0 0.0
    %693 = vmatpush1.msra.mxu0 0.0
    %694 = vmatprep.subr.mxu0 0.0
    %695 = vmatpush1.msra.mxu0 0.0
    %696 = vmatprep.subr.mxu0 0.0
    %697 = vmatpush1.msra.mxu0 0.0
    %698 = vmatprep.subr.mxu0 0.0
    %699 = vmatpush1.msra.mxu0 0.0
    %700 = vmatprep.subr.mxu0 0.0
    %701 = vmatpush1.msra.mxu0 0.0
    %702 = vmatprep.subr.mxu0 0.0
    %703 = vmatpush1.msra.mxu0 0.0
    %704 = vmatprep.subr.mxu0 0.0
    %705 = vmatpush1.msra.mxu0 0.0
    %706 = vmatprep.subr.mxu0 0.0
    %707 = vmatpush1.msra.mxu0 0.0
    %708 = vmatprep.subr.mxu0 0.0
    %709 = vmatpush1.msra.mxu0 0.0
    %710 = vmatprep.subr.mxu0 0.0
    %711 = vmatpush1.msra.mxu0 0.0
    %712 = vmatprep.subr.mxu0 0.0
    %713 = vmatpush1.msra.mxu0 0.0
    %714 = vmatprep.subr.mxu0 0.0
    %715 = vmatpush1.msra.mxu0 0.0
    %716 = vmatprep.subr.mxu0 0.0
    %717 = vmatpush1.msra.mxu0 0.0
    %718 = vmatprep.subr.mxu0 0.0
    %719 = vmatpush1.msra.mxu0 0.0
    %720 = vmatprep.subr.mxu0 0.0
    %721 = vmatpush1.msra.mxu0 0.0
    %722 = vmatprep.subr.mxu0 0.0
    %723 = vmatpush1.msra.mxu0 0.0
    %724 = vmatprep.subr.mxu0 0.0
    %725 = vmatpush1.msra.mxu0 0.0
    %726 = vmatprep.mubr.f32.mxu0 0.0
    %727 = vmatmul.mubr.f32.gmra.mrb[0].mxu0 %v660
    %v728 = vpop.f32.mrb[0].mxu0
    %v729 = vadd.f32 0.0, %v728
    %v730 = vpop.f32.mrb[0].mxu0
    %731 = vdwg.mxu0
    %v732 = vadd.f32 %v658, %v729
    %v733 = vtanh.pop %v732
    %s734 = scalar_lea.vmem [#allocation3], 48
    %735 = vst.msk [vmem:[%s734] sm:$0xff] %vm43, %v733
    %s736 = scalar_lea.vmem [#allocation2], 56
    %v737 = vld [vmem:[%s736] sm:$0xff]
    %v739 = vsel %vm43, %v733, 0
    %741 = vmatprep.subr.mxu0 0.0
    %742 = vmatpush1.msra.mxu0 %v181
    %743 = vmatprep.subr.mxu0 0.0
    %744 = vmatpush1.msra.mxu0 %v182
    %745 = vmatprep.subr.mxu0 0.0
    %746 = vmatpush1.msra.mxu0 %v183
    %747 = vmatprep.subr.mxu0 0.0
    %748 = vmatpush1.msra.mxu0 %v184
    %749 = vmatprep.subr.mxu0 0.0
    %750 = vmatpush1.msra.mxu0 0.0
    %751 = vmatprep.subr.mxu0 0.0
    %752 = vmatpush1.msra.mxu0 0.0
    %753 = vmatprep.subr.mxu0 0.0
    %754 = vmatpush1.msra.mxu0 0.0
    %755 = vmatprep.subr.mxu0 0.0
    %756 = vmatpush1.msra.mxu0 0.0
    %757 = vmatprep.subr.mxu0 0.0
    %758 = vmatpush1.msra.mxu0 0.0
    %759 = vmatprep.subr.mxu0 0.0
    %760 = vmatpush1.msra.mxu0 0.0
    %761 = vmatprep.subr.mxu0 0.0
    %762 = vmatpush1.msra.mxu0 0.0
    %763 = vmatprep.subr.mxu0 0.0
    %764 = vmatpush1.msra.mxu0 0.0
    %765 = vmatprep.subr.mxu0 0.0
    %766 = vmatpush1.msra.mxu0 0.0
    %767 = vmatprep.subr.mxu0 0.0
    %768 = vmatpush1.msra.mxu0 0.0
    %769 = vmatprep.subr.mxu0 0.0
    %770 = vmatpush1.msra.mxu0 0.0
    %771 = vmatprep.subr.mxu0 0.0
    %772 = vmatpush1.msra.mxu0 0.0
    %773 = vmatprep.subr.mxu0 0.0
    %774 = vmatpush1.msra.mxu0 0.0
    %775 = vmatprep.subr.mxu0 0.0
    %776 = vmatpush1.msra.mxu0 0.0
    %777 = vmatprep.subr.mxu0 0.0
    %778 = vmatpush1.msra.mxu0 0.0
    %779 = vmatprep.subr.mxu0 0.0
    %780 = vmatpush1.msra.mxu0 0.0
    %781 = vmatprep.subr.mxu0 0.0
    %782 = vmatpush1.msra.mxu0 0.0
    %783 = vmatprep.subr.mxu0 0.0
    %784 = vmatpush1.msra.mxu0 0.0
    %785 = vmatprep.subr.mxu0 0.0
    %786 = vmatpush1.msra.mxu0 0.0
    %787 = vmatprep.subr.mxu0 0.0
    %788 = vmatpush1.msra.mxu0 0.0
    %789 = vmatprep.subr.mxu0 0.0
    %790 = vmatpush1.msra.mxu0 0.0
    %791 = vmatprep.subr.mxu0 0.0
    %792 = vmatpush1.msra.mxu0 0.0
    %793 = vmatprep.subr.mxu0 0.0
    %794 = vmatpush1.msra.mxu0 0.0
    %795 = vmatprep.subr.mxu0 0.0
    %796 = vmatpush1.msra.mxu0 0.0
    %797 = vmatprep.subr.mxu0 0.0
    %798 = vmatpush1.msra.mxu0 0.0
    %799 = vmatprep.subr.mxu0 0.0
    %800 = vmatpush1.msra.mxu0 0.0
    %801 = vmatprep.subr.mxu0 0.0
    %802 = vmatpush1.msra.mxu0 0.0
    %803 = vmatprep.subr.mxu0 0.0
    %804 = vmatpush1.msra.mxu0 0.0
    %805 = vmatprep.mubr.f32.mxu0 0.0
    %806 = vmatmul.mubr.f32.gmra.mrb[0].mxu0 %v739
    %v807 = vpop.f32.mrb[0].mxu0
    %v808 = vadd.f32 0.0, %v807
    %v809 = vpop.f32.mrb[0].mxu0
    %810 = vdwg.mxu0
    %v811 = vadd.f32 %v737, %v808
    %v812 = vtanh.pop %v811
    %s813 = scalar_lea.vmem [#allocation3], 56
    %814 = vst.msk [vmem:[%s813] sm:$0xff] %vm43, %v812
    %v815 = vld [vmem:[#allocation3] sm:$0xff]
    %v816 = vld [vmem:[#allocation3 + $0x8] sm:$0xff]
    %v817 = vld [vmem:[#allocation3 + $0x10] sm:$0xff]
    %v818 = vld [vmem:[#allocation3 + $0x18] sm:$0xff]
    %v819 = vld [vmem:[#allocation3 + $0x20] sm:$0xff]
    %v820 = vld [vmem:[#allocation3 + $0x28] sm:$0xff]
    %v821 = vld [vmem:[#allocation3 + $0x30] sm:$0xff]
    %v822 = vld [vmem:[#allocation3 + $0x38] sm:$0xff]
    %v823 = vld [vmem:[%s4] sm:$0xff]
    %v824 = vld [vmem:[%s4 + $0x8] sm:$0xff]
    %v825 = vld [vmem:[%s4 + $0x10] sm:$0xff]
    %v826 = vld [vmem:[%s4 + $0x18] sm:$0xff]
    %v827 = vld [vmem:[%s5] sm:$0x1]
    %v829 = vlaneseq
    %v830 = vshrl.u32 %v829, 7
    %v831 = vsub.s32 0, %v830
    %v832 = vrot.slane %v827, %v831
    %v835 = vsel %vm43, %v815, 0
    %v838 = vsel %vm43, %v816, 0
    %v841 = vsel %vm43, %v817, 0
    %v844 = vsel %vm43, %v818, 0
    %v847 = vsel %vm43, %v819, 0
    %v850 = vsel %vm43, %v820, 0
    %v853 = vsel %vm43, %v821, 0
    %v856 = vsel %vm43, %v822, 0
    %858 = vmatprep.subr.mxu0 0.0
    %859 = vmatpush1.msra.mxu0 %v823
    %860 = vmatprep.subr.mxu0 0.0
    %861 = vmatpush1.msra.mxu0 %v824
    %862 = vmatprep.subr.mxu0 0.0
    %863 = vmatpush1.msra.mxu0 %v825
    %864 = vmatprep.subr.mxu0 0.0
    %865 = vmatpush1.msra.mxu0 %v826
    %866 = vmatprep.subr.mxu0 0.0
    %867 = vmatpush1.msra.mxu0 0.0
    %868 = vmatprep.subr.mxu0 0.0
    %869 = vmatpush1.msra.mxu0 0.0
    %870 = vmatprep.subr.mxu0 0.0
    %871 = vmatpush1.msra.mxu0 0.0
    %872 = vmatprep.subr.mxu0 0.0
    %873 = vmatpush1.msra.mxu0 0.0
    %874 = vmatprep.subr.mxu0 0.0
    %875 = vmatpush1.msra.mxu0 0.0
    %876 = vmatprep.subr.mxu0 0.0
    %877 = vmatpush1.msra.mxu0 0.0
    %878 = vmatprep.subr.mxu0 0.0
    %879 = vmatpush1.msra.mxu0 0.0
    %880 = vmatprep.subr.mxu0 0.0
    %881 = vmatpush1.msra.mxu0 0.0
    %882 = vmatprep.subr.mxu0 0.0
    %883 = vmatpush1.msra.mxu0 0.0
    %884 = vmatprep.subr.mxu0 0.0
    %885 = vmatpush1.msra.mxu0 0.0
    %886 = vmatprep.subr.mxu0 0.0
    %887 = vmatpush1.msra.mxu0 0.0
    %888 = vmatprep.subr.mxu0 0.0
    %889 = vmatpush1.msra.mxu0 0.0
    %890 = vmatprep.subr.mxu0 0.0
    %891 = vmatpush1.msra.mxu0 0.0
    %892 = vmatprep.subr.mxu0 0.0
    %893 = vmatpush1.msra.mxu0 0.0
    %894 = vmatprep.subr.mxu0 0.0
    %895 = vmatpush1.msra.mxu0 0.0
    %896 = vmatprep.subr.mxu0 0.0
    %897 = vmatpush1.msra.mxu0 0.0
    %898 = vmatprep.subr.mxu0 0.0
    %899 = vmatpush1.msra.mxu0 0.0
    %900 = vmatprep.subr.mxu0 0.0
    %901 = vmatpush1.msra.mxu0 0.0
    %902 = vmatprep.subr.mxu0 0.0
    %903 = vmatpush1.msra.mxu0 0.0
    %904 = vmatprep.subr.mxu0 0.0
    %905 = vmatpush1.msra.mxu0 0.0
    %906 = vmatprep.subr.mxu0 0.0
    %907 = vmatpush1.msra.mxu0 0.0
    %908 = vmatprep.subr.mxu0 0.0
    %909 = vmatpush1.msra.mxu0 0.0
    %910 = vmatprep.subr.mxu0 0.0
    %911 = vmatpush1.msra.mxu0 0.0
    %912 = vmatprep.subr.mxu0 0.0
    %913 = vmatpush1.msra.mxu0 0.0
    %914 = vmatprep.subr.mxu0 0.0
    %915 = vmatpush1.msra.mxu0 0.0
    %916 = vmatprep.subr.mxu0 0.0
    %917 = vmatpush1.msra.mxu0 0.0
    %918 = vmatprep.subr.mxu0 0.0
    %919 = vmatpush1.msra.mxu0 0.0
    %920 = vmatprep.subr.mxu0 0.0
    %921 = vmatpush1.msra.mxu0 0.0
    %922 = vmatprep.mubr.f32.mxu0 0.0
    %923 = vmatmul.mubr.f32.gmra.mrb[0].mxu0 %v835
    %v924 = vpop.f32.mrb[0].mxu0
    %v925 = vadd.f32 %v832, %v924
    %v926 = vpop.f32.mrb[0].mxu0
    %927 = vmatprep.mubr.f32.mxu0 0.0
    %928 = vmatmul.mubr.f32.gmra.mrb[0].mxu0 %v838
    %v929 = vpop.f32.mrb[0].mxu0
    %v930 = vadd.f32 %v832, %v929
    %v931 = vpop.f32.mrb[0].mxu0
    %932 = vmatprep.mubr.f32.mxu0 0.0
    %933 = vmatmul.mubr.f32.gmra.mrb[0].mxu0 %v841
    %v934 = vpop.f32.mrb[0].mxu0
    %v935 = vadd.f32 %v832, %v934
    %v936 = vpop.f32.mrb[0].mxu0
    %937 = vmatprep.mubr.f32.mxu0 0.0
    %938 = vmatmul.mubr.f32.gmra.mrb[0].mxu0 %v844
    %v939 = vpop.f32.mrb[0].mxu0
    %v940 = vadd.f32 %v832, %v939
    %v941 = vpop.f32.mrb[0].mxu0
    %942 = vmatprep.mubr.f32.mxu0 0.0
    %943 = vmatmul.mubr.f32.gmra.mrb[0].mxu0 %v847
    %v944 = vpop.f32.mrb[0].mxu0
    %v945 = vadd.f32 %v832, %v944
    %v946 = vpop.f32.mrb[0].mxu0
    %947 = vmatprep.mubr.f32.mxu0 0.0
    %948 = vmatmul.mubr.f32.gmra.mrb[0].mxu0 %v850
    %v949 = vpop.f32.mrb[0].mxu0
    %v950 = vadd.f32 %v832, %v949
    %v951 = vpop.f32.mrb[0].mxu0
    %952 = vmatprep.mubr.f32.mxu0 0.0
    %953 = vmatmul.mubr.f32.gmra.mrb[0].mxu0 %v853
    %v954 = vpop.f32.mrb[0].mxu0
    %v955 = vadd.f32 %v832, %v954
    %v956 = vpop.f32.mrb[0].mxu0
    %957 = vmatprep.mubr.f32.mxu0 0.0
    %958 = vmatmul.mubr.f32.gmra.mrb[0].mxu0 %v856
    %v959 = vpop.f32.mrb[0].mxu0
    %v960 = vadd.f32 %v832, %v959
    %v961 = vpop.f32.mrb[0].mxu0
    %962 = vdwg.mxu0
    %963 = vmax.xlane.f32.xlu0 %v925
    %v964 = vpop.xlane.xlu0 %963
    %965 = vmax.xlane.f32.xlu0 %v930
    %v966 = vpop.xlane.xlu0 %965
    %967 = vmax.xlane.f32.xlu0 %v935
    %v968 = vpop.xlane.xlu0 %967
    %969 = vmax.xlane.f32.xlu0 %v940
    %v970 = vpop.xlane.xlu0 %969
    %971 = vmax.xlane.f32.xlu0 %v945
    %v972 = vpop.xlane.xlu0 %971
    %973 = vmax.xlane.f32.xlu0 %v950
    %v974 = vpop.xlane.xlu0 %973
    %975 = vmax.xlane.f32.xlu0 %v955
    %v976 = vpop.xlane.xlu0 %975
    %977 = vmax.xlane.f32.xlu0 %v960
    %v978 = vpop.xlane.xlu0 %977
    %v979 = vsub.f32 %v925, %v964
    %v980 = vsub.f32 %v930, %v966
    %v981 = vsub.f32 %v935, %v968
    %v982 = vsub.f32 %v940, %v970
    %v983 = vsub.f32 %v945, %v972
    %v984 = vsub.f32 %v950, %v974
    %v985 = vsub.f32 %v955, %v976
    %v986 = vsub.f32 %v960, %v978
    %v987 = vmul.f32 %v979, 1.442695
    %v988 = vpow.pop %v987
    %v989 = vmul.f32 %v980, 1.442695
    %v990 = vpow.pop %v989
    %v991 = vmul.f32 %v981, 1.442695
    %v992 = vpow.pop %v991
    %v993 = vmul.f32 %v982, 1.442695
    %v994 = vpow.pop %v993
    %v995 = vmul.f32 %v983, 1.442695
    %v996 = vpow.pop %v995
    %v997 = vmul.f32 %v984, 1.442695
    %v998 = vpow.pop %v997
    %v999 = vmul.f32 %v985, 1.442695
    %v1000 = vpow.pop %v999
    %v1001 = vmul.f32 %v986, 1.442695
    %v1002 = vpow.pop %v1001
    %1003 = vadd.xlane.f32.xlu0 %v988
    %v1004 = vpop.xlane.xlu0 %1003
    %1005 = vadd.xlane.f32.xlu0 %v990
    %v1006 = vpop.xlane.xlu0 %1005
    %1007 = vadd.xlane.f32.xlu0 %v992
    %v1008 = vpop.xlane.xlu0 %1007
    %1009 = vadd.xlane.f32.xlu0 %v994
    %v1010 = vpop.xlane.xlu0 %1009
    %1011 = vadd.xlane.f32.xlu0 %v996
    %v1012 = vpop.xlane.xlu0 %1011
    %1013 = vadd.xlane.f32.xlu0 %v998
    %v1014 = vpop.xlane.xlu0 %1013
    %1015 = vadd.xlane.f32.xlu0 %v1000
    %v1016 = vpop.xlane.xlu0 %1015
    %1017 = vadd.xlane.f32.xlu0 %v1002
    %v1018 = vpop.xlane.xlu0 %1017
    %v1019 = vlog2.pop %v1004
    %v1020 = vmul.f32 %v1019, 0.6931472
    %v1021 = vlog2.pop %v1006
    %v1022 = vmul.f32 %v1021, 0.6931472
    %v1023 = vlog2.pop %v1008
    %v1024 = vmul.f32 %v1023, 0.6931472
    %v1025 = vlog2.pop %v1010
    %v1026 = vmul.f32 %v1025, 0.6931472
    %v1027 = vlog2.pop %v1012
    %v1028 = vmul.f32 %v1027, 0.6931472
    %v1029 = vlog2.pop %v1014
    %v1030 = vmul.f32 %v1029, 0.6931472
    %v1031 = vlog2.pop %v1016
    %v1032 = vmul.f32 %v1031, 0.6931472
    %v1033 = vlog2.pop %v1018
    %v1034 = vmul.f32 %v1033, 0.6931472
    %v1035 = vsub.f32 %v979, %v1020
    %v1036 = vsub.f32 %v980, %v1022
    %v1037 = vsub.f32 %v981, %v1024
    %v1038 = vsub.f32 %v982, %v1026
    %v1039 = vsub.f32 %v983, %v1028
    %v1040 = vsub.f32 %v984, %v1030
    %v1041 = vsub.f32 %v985, %v1032
    %v1042 = vsub.f32 %v986, %v1034
    %1043 = vst [vmem:[#allocation4] sm:$0xff] %v1035
    %1044 = vst [vmem:[#allocation4 + $0x8] sm:$0xff] %v1036
    %1045 = vst [vmem:[#allocation4 + $0x10] sm:$0xff] %v1037
    %1046 = vst [vmem:[#allocation4 + $0x18] sm:$0xff] %v1038
    %1047 = vst [vmem:[#allocation4 + $0x20] sm:$0xff] %v1039
    %1048 = vst [vmem:[#allocation4 + $0x28] sm:$0xff] %v1040
    %1049 = vst [vmem:[#allocation4 + $0x30] sm:$0xff] %v1041
    %1050 = vst [vmem:[#allocation4 + $0x38] sm:$0xff] %v1042
    // Predicated region
    $region26: #{rnn_forward.1} parent=1 // pred_check
      _
    $region27: #{rnn_forward.1} parent=1 // pred_check_branch
      %1052 = sbr.rel (0) target = $region29
    $region28: #{rnn_forward.1} parent=1 // pred_region
      %s1054 = ssub.s32 1024, 1024
      %1055 = vsyncadd [#allocation5], %s1054
      %s1056 = sshll.u32 [#allocation4], 4
      %s1057 = int_to_ptr.vmem [resolvable:$true] %s1056
      %1062 = dma.vmem_to_hbm [thread:$0]  %s1057, 1024, %s6, [#allocation5], 128, 128, 8
    $region29: #{rnn_forward.1} parent=1 // pred_fallthru
      _
    // Predicated region
    $region30: #{rnn_forward.1} parent=1 // pred_check
      _
    $region31: #{rnn_forward.1} parent=1 // pred_check_branch
      %1064 = sbr.rel (0) target = $region33
    $region32: #{rnn_forward.1} parent=1 // pred_region
      %1065 = dma.done [#allocation5], 1024
    $region33: #{rnn_forward.1} parent=1 // pred_fallthru
      _
    %1066 = vsyncpa [#allocation5], 1

</llo_original>
